<compile_context>
chip_gen: v7x
topology: tpu7x:2x2x1
jax: 0.10.0
libtpu: 0.0.40
codegen_flags: <defaults>
</compile_context>

<pallas_src>
import functools

import jax
import jax.numpy as jnp
from jax import lax
from jax.experimental import pallas as pl
from jax.experimental.pallas import tpu as pltpu

_MAXQ_ACT = 255.0      # 2**8 - 1 activation quantization levels
_QX_CENTER = 128.0     # constant centering so q_x - 128 in [-128, 127] (bf16-exact)
_EPS = 1e-8


def _round_up(a, b):
    return (a + b - 1) // b * b


def _vmem_capacity_bytes():
    """Physical VMEM per core; conservative 64 MiB (v7x) fallback."""
    try:
        cap = int(pltpu.get_tpu_info().vmem_capacity_bytes)
        if cap > 0:
            return cap
    except Exception:
        pass
    return 64 << 20


def _linear_asq_kernel(x_ref, w_ref, consts_ref, o_ref,
                       qxc_ref, sx_ref, t1_ref, t2_ref):
    # ---- per-token quantization, ONCE per M tile (j == 0), kept in scratch ----
    @pl.when(pl.program_id(1) == 0)
    def _quantize():
        x = x_ref[...].astype(jnp.float32)                        # (tm, K)
        xmax = jnp.max(x, axis=-1, keepdims=True)                 # (tm, 1)
        xmin = jnp.min(x, axis=-1, keepdims=True)                 # (tm, 1)
        scale_x = jnp.maximum(xmax - xmin, _EPS) * (1.0 / _MAXQ_ACT)
        inv_sx = 1.0 / scale_x                                    # tm divides only
        zero_x = jnp.round(-xmin / scale_x)                       # matches reference
        qx = jnp.clip(jnp.round(x * inv_sx) + zero_x, 0.0, _MAXQ_ACT)
        sum_qx = jnp.sum(qx, axis=-1, keepdims=True)              # (tm, 1)
        k = jnp.float32(x.shape[-1])
        qxc_ref[...] = (qx - _QX_CENTER).astype(jnp.bfloat16)      # exact in bf16
        sx_ref[...] = scale_x
        t1_ref[...] = _QX_CENTER - zero_x                         # multiplies ws*sum(q_w)
        t2_ref[...] = k * zero_x - sum_qx                         # multiplies ws*wz

    # ---- MXU matmul: (tm, K) bf16 x (K, tn) bf16 -> f32. Weight is already in
    # (K, N) layout (K on sublanes, N on lanes): no in-kernel transpose. ----
    acc = lax.dot_general(
        qxc_ref[...], w_ref[...].astype(jnp.bfloat16),
        (((1,), (0,)), ((), ())),
        preferred_element_type=jnp.float32)                       # (tm, tn)

    # ---- asym_dequant_hprec epilogue with pre-folded per-channel constants ----
    #   y = sx*(acc*ws + (128-zx)*ws*sum(q_w) + (K*zx-sum(q_x))*ws*wz) + bias
    ws = consts_ref[0:1, :]      # weight_scales
    wsums = consts_ref[1:2, :]   # weight_scales * sum_k(q_w)
    wzs = consts_ref[2:3, :]     # weight_scales * weight_zeros
    b = consts_ref[3:4, :]       # bias (zeros when disabled)
    o_ref[...] = sx_ref[...] * (acc * ws + t1_ref[...] * wsums
                                + t2_ref[...] * wzs) + b


@functools.partial(jax.jit, static_argnames=("tm", "tn"))
def _linear_asq_impl(x, weight, weight_scales, weight_zeros, bias, *, tm, tn):
    B, S, K = x.shape
    N = weight.shape[0]
    M = B * S

    # Clamp tiles to the problem (multiples of 8 / 128), then pad M and N.
    tm_eff = _round_up(min(tm, _round_up(max(M, 8), 8)), 8)
    tn_eff = _round_up(min(tn, _round_up(max(N, 128), 128)), 128)
    M_pad = _round_up(M, tm_eff)
    N_pad = _round_up(N, tn_eff)

    x2 = x.reshape(M, K)                       # keep native dtype (bf16/f32)
    if M_pad != M:
        x2 = jnp.pad(x2, ((0, M_pad - M), (0, 0)))

    # Constant-weight preprocessing: transpose once, fold dequant constants.
    w_t = weight.T                                               # (K, N) int8
    wf = weight.astype(jnp.float32)
    ws_row = weight_scales.reshape(1, N).astype(jnp.float32)
    wz_row = weight_zeros.reshape(1, N).astype(jnp.float32)
    wsum_row = jnp.sum(wf, axis=1).reshape(1, N)
    bias_row = (jnp.zeros((1, N), jnp.float32) if bias is None
                else bias.reshape(1, N).astype(jnp.float32))
    consts = jnp.concatenate(
        [ws_row, ws_row * wsum_row, ws_row * wz_row, bias_row,
         jnp.zeros((4, N), jnp.float32)], axis=0)                # (8, N)
    if N_pad != N:
        w_t = jnp.pad(w_t, ((0, 0), (0, N_pad - N)))
        consts = jnp.pad(consts, ((0, 0), (0, N_pad - N)))

    grid = (M_pad // tm_eff, N_pad // tn_eff)
    x_item = x2.dtype.itemsize

    # VMEM budget: pipeline buffers + persistent scratch + in-kernel temporaries.
    vmem_bytes = (2 * tm_eff * K * x_item       # x tile (double-buffered)
                  + 2 * K * tn_eff * 1          # int8 weight tile
                  + 2 * 8 * tn_eff * 4          # packed constant rows
                  + 2 * tm_eff * tn_eff * 4     # f32 output tile
                  + tm_eff * K * 2              # qx-128 bf16 scratch
                  + 3 * tm_eff * 128 * 4        # per-token scalar scratch rows
                  + K * tn_eff * 2              # in-kernel bf16 weight cast
                  + tm_eff * tn_eff * 4         # f32 accumulator
                  + 2 * tm_eff * K * 4)         # quantizer elementwise temps
    cap = int(0.75 * _vmem_capacity_bytes())    # leave headroom (48 MiB on v7x)
    vmem_limit = int(min(max(vmem_bytes + (4 << 20), 16 << 20), cap))

    cost = pl.CostEstimate(
        flops=2 * M_pad * N_pad * K,
        transcendentals=0,
        bytes_accessed=(M_pad * K * x_item            # x streamed once (resident over j)
                        + grid[0] * N_pad * K         # int8 weight re-read per M tile
                        + M_pad * N_pad * 4           # output write
                        + grid[0] * 8 * N_pad * 4))   # constant rows

    out = pl.pallas_call(
        _linear_asq_kernel,
        out_shape=jax.ShapeDtypeStruct((M_pad, N_pad), jnp.float32),
        grid_spec=pltpu.PrefetchScalarGridSpec(
            num_scalar_prefetch=0,
            grid=grid,
            in_specs=[
                pl.BlockSpec((tm_eff, K), lambda i, j: (i, 0)),   # activations
                pl.BlockSpec((K, tn_eff), lambda i, j: (0, j)),   # weight^T (int8)
                pl.BlockSpec((8, tn_eff), lambda i, j: (0, j)),   # packed constants
            ],
            out_specs=pl.BlockSpec((tm_eff, tn_eff), lambda i, j: (i, j)),
            scratch_shapes=[
                pltpu.VMEM((tm_eff, K), jnp.bfloat16),    # q_x - 128
                pltpu.VMEM((tm_eff, 1), jnp.float32),     # scale_x
                pltpu.VMEM((tm_eff, 1), jnp.float32),     # 128 - zero_x
                pltpu.VMEM((tm_eff, 1), jnp.float32),     # K*zero_x - sum(q_x)
            ]),
        compiler_params=pltpu.CompilerParams(
            # j must stay sequential per core: the quantization scratch written
            # at j == 0 is reused for every N tile of the same M tile.
            dimension_semantics=("parallel", "arbitrary"),
            vmem_limit_bytes=vmem_limit),
        cost_estimate=cost,
    )(x2, w_t, consts)

    return out[:M, :N].reshape(B, S, N)


def linear_quant8bit_asq(x, weight, weight_scales, weight_zeros, bias=None, *,
                         tm=None, tn=256):
    """Forward pass of LinearQuant8bitASQ (require_quantizer=True)."""
    K = x.shape[-1]
    if tm is None:
        cap = _vmem_capacity_bytes()
        # 128 MiB-VMEM parts (v5e/v6e): tm=512 makes the inner step compute-bound
        # vs the streamed int8 weight.  64 MiB parts (v7x): keep tm=256 — already
        # compute-bound, VMEM is the binding constraint.
        big_x_tile = 2 * 512 * K * x.dtype.itemsize + 512 * K * 2
        tm = 512 if (cap >= (96 << 20) and big_x_tile <= cap // 2) else 256
    return _linear_asq_impl(x, weight, weight_scales, weight_zeros, bias,
                            tm=tm, tn=tn)


if __name__ == "__main__":
    key = jax.random.PRNGKey(0)
    B, S = 2, 8
    in_features, out_features = 32, 64
    kx, kw, ks, kz, kb = jax.random.split(key, 5)

    x = jax.random.normal(kx, (B, S, in_features), dtype=jnp.float32)

    # Buffers with the shapes declared in LinearQuant8bitASQ.__init__.
    weight = jax.random.randint(kw, (out_features, in_features), 1, 7,
                                dtype=jnp.int32).astype(jnp.int8)
    weight_scales = jax.random.uniform(ks, (out_features, 1), minval=0.005,
                                       maxval=0.02, dtype=jnp.float32)
    weight_zeros = jnp.round(jax.random.uniform(kz, (out_features, 1),
                                                minval=0.0, maxval=8.0)
                             ).astype(jnp.float32)
    bias_vec = jax.random.normal(kb, (out_features,), dtype=jnp.float32) * 0.1

    # Pure-JAX reference reproducing quantize -> int matmul -> hprec dequant.
    def ref(x, w, ws, wz, bias=None):
        xmax = x.max(-1, keepdims=True)
        xmin = x.min(-1, keepdims=True)
        sx = jnp.maximum(xmax - xmin, _EPS) / _MAXQ_ACT
        zx = jnp.round(-xmin / sx)
        qx = jnp.clip(jnp.round(x / sx) + zx, 0.0, _MAXQ_ACT)
        wf = w.astype(jnp.float32)
        acc = jnp.einsum("bsk,nk->bsn", qx, wf)
        wsum = wf.sum(-1)
        k = jnp.float32(x.shape[-1])
        y = sx * (acc * ws[:, 0] - zx * (ws[:, 0] * wsum)
                  + (k * zx - qx.sum(-1, keepdims=True)) * (ws[:, 0] * wz[:, 0]))
        if bias is not None:
            y = y + bias
        return y

    # No-bias path (module default bias=False).
    y = linear_quant8bit_asq(x, weight, weight_scales, weight_zeros)
    y = jax.block_until_ready(y)
    y_ref = ref(x, weight, weight_scales, weight_zeros)
    assert y.shape == (B, S, out_features) and y.dtype == jnp.float32
    assert jnp.allclose(y, y_ref, rtol=2e-3, atol=2e-3), \
        float(jnp.max(jnp.abs(y - y_ref)))

    # Bias path (bias folded into the kernel epilogue).
    yb = linear_quant8bit_asq(x, weight, weight_scales, weight_zeros, bias_vec)
    yb = jax.block_until_ready(yb)
    yb_ref = ref(x, weight, weight_scales, weight_zeros, bias_vec)
    assert jnp.allclose(yb, yb_ref, rtol=2e-3, atol=2e-3), \
        float(jnp.max(jnp.abs(yb - yb_ref)))

    print("KERNEL_OK")
</pallas_src>

<mosaic_0001>
module attributes {stable_mosaic.version = 11 : i64} {
  func.func @_linear_asq_kernel(%arg0: i32, %arg1: i32, %arg2: memref<16x32xf32, #tpu.memory_space<vmem>>, %arg3: memref<32x128xi8, #tpu.memory_space<vmem>>, %arg4: memref<8x128xf32, #tpu.memory_space<vmem>>, %arg5: memref<16x128xf32, #tpu.memory_space<vmem>>, %arg6: memref<16x32xbf16, #tpu.memory_space<vmem>>, %arg7: memref<16x1xf32, #tpu.memory_space<vmem>>, %arg8: memref<16x1xf32, #tpu.memory_space<vmem>>, %arg9: memref<16x1xf32, #tpu.memory_space<vmem>>) attributes {dimension_semantics = [#tpu.dimension_semantics<parallel>, #tpu.dimension_semantics<arbitrary>], iteration_bounds = array<i64: 1, 1>, scalar_prefetch = 0 : i64, scratch_operands = 4 : i64, tpu.core_type = #tpu.core_type<tc>, window_params = [{transform_indices = @transform_0, window_bounds = array<i64: 16, 32>}, {transform_indices = @transform_1, window_bounds = array<i64: 32, 128>}, {transform_indices = @transform_2, window_bounds = array<i64: 8, 128>}, {transform_indices = @transform_3, window_bounds = array<i64: 16, 128>}]} {
    %c0_i32 = arith.constant 0 : i32
    %0 = arith.cmpi eq, %arg1, %c0_i32 : i32
    %1 = arith.extui %0 : i1 to i32
    %c0_i32_0 = arith.constant 0 : i32
    %2 = arith.cmpi ne, %1, %c0_i32_0 : i32
    scf.if %2 {
      %c0_17 = arith.constant 0 : index
      %c0_18 = arith.constant 0 : index
      %29 = vector.load %arg2[%c0_17, %c0_18] : memref<16x32xf32, #tpu.memory_space<vmem>>, vector<16x32xf32>
      %cst_19 = arith.constant dense<0xFF800000> : vector<16xf32>
      %30 = vector.multi_reduction <maximumf>, %29, %cst_19 [1] : vector<16x32xf32> to vector<16xf32>
      %31 = vector.shape_cast %30 : vector<16xf32> to vector<16x1xf32>
      %cst_20 = arith.constant dense<0x7F800000> : vector<16xf32>
      %32 = vector.multi_reduction <minimumf>, %29, %cst_20 [1] : vector<16x32xf32> to vector<16xf32>
      %33 = vector.shape_cast %32 : vector<16xf32> to vector<16x1xf32>
      %34 = arith.subf %31, %33 : vector<16x1xf32>
      %cst_21 = arith.constant 9.99999993E-9 : f32
      %35 = vector.broadcast %cst_21 : f32 to vector<16x1xf32>
      %36 = arith.maximumf %34, %35 : vector<16x1xf32>
      %cst_22 = arith.constant 0.00392156886 : f32
      %37 = vector.broadcast %cst_22 : f32 to vector<16x1xf32>
      %38 = arith.mulf %36, %37 : vector<16x1xf32>
      %cst_23 = arith.constant 1.000000e+00 : f32
      %39 = vector.broadcast %cst_23 : f32 to vector<16x1xf32>
      %40 = arith.divf %39, %38 : vector<16x1xf32>
      %cst_24 = arith.constant 0.000000e+00 : f32
      %41 = vector.broadcast %cst_24 : f32 to vector<16x1xf32>
      %42 = arith.subf %41, %33 : vector<16x1xf32>
      %43 = arith.divf %42, %38 : vector<16x1xf32>
      %44 = math.roundeven %43 : vector<16x1xf32>
      %45 = vector.broadcast %40 : vector<16x1xf32> to vector<16x32xf32>
      %46 = arith.mulf %29, %45 : vector<16x32xf32>
      %47 = math.roundeven %46 : vector<16x32xf32>
      %48 = vector.broadcast %44 : vector<16x1xf32> to vector<16x32xf32>
      %49 = arith.addf %47, %48 : vector<16x32xf32>
      %cst_25 = arith.constant 0.000000e+00 : f32
      %cst_26 = arith.constant 2.550000e+02 : f32
      %50 = vector.broadcast %cst_25 : f32 to vector<16x32xf32>
      %51 = arith.maximumf %50, %49 : vector<16x32xf32>
      %52 = vector.broadcast %cst_26 : f32 to vector<16x32xf32>
      %53 = arith.minimumf %52, %51 : vector<16x32xf32>
      %cst_27 = arith.constant dense<0.000000e+00> : vector<16xf32>
      %54 = vector.multi_reduction <add>, %53, %cst_27 [1] : vector<16x32xf32> to vector<16xf32>
      %55 = vector.shape_cast %54 : vector<16xf32> to vector<16x1xf32>
      %cst_28 = arith.constant 1.280000e+02 : f32
      %56 = vector.broadcast %cst_28 : f32 to vector<16x32xf32>
      %57 = arith.subf %53, %56 : vector<16x32xf32>
      %58 = arith.truncf %57 : vector<16x32xf32> to vector<16x32xbf16>
      %c0_29 = arith.constant 0 : index
      %c0_30 = arith.constant 0 : index
      %59 = vector.load %arg6[%c0_29, %c0_30] : memref<16x32xbf16, #tpu.memory_space<vmem>>, vector<16x32xbf16>
      tpu.vector_store %arg6[%c0_29, %c0_30], %58 {strides = array<i32>} : memref<16x32xbf16, #tpu.memory_space<vmem>>, vector<16x32xbf16>,
      %c0_31 = arith.constant 0 : index
      %c0_32 = arith.constant 0 : index
      %60 = vector.load %arg7[%c0_31, %c0_32] : memref<16x1xf32, #tpu.memory_space<vmem>>, vector<16x1xf32>
      tpu.vector_store %arg7[%c0_31, %c0_32], %38 {strides = array<i32>} : memref<16x1xf32, #tpu.memory_space<vmem>>, vector<16x1xf32>,
      %cst_33 = arith.constant 1.280000e+02 : f32
      %61 = vector.broadcast %cst_33 : f32 to vector<16x1xf32>
      %62 = arith.subf %61, %44 : vector<16x1xf32>
      %c0_34 = arith.constant 0 : index
      %c0_35 = arith.constant 0 : index
      %63 = vector.load %arg8[%c0_34, %c0_35] : memref<16x1xf32, #tpu.memory_space<vmem>>, vector<16x1xf32>
      tpu.vector_store %arg8[%c0_34, %c0_35], %62 {strides = array<i32>} : memref<16x1xf32, #tpu.memory_space<vmem>>, vector<16x1xf32>,
      %cst_36 = arith.constant 3.200000e+01 : f32
      %64 = vector.broadcast %cst_36 : f32 to vector<16x1xf32>
      %65 = arith.mulf %64, %44 : vector<16x1xf32>
      %66 = arith.subf %65, %55 : vector<16x1xf32>
      %c0_37 = arith.constant 0 : index
      %c0_38 = arith.constant 0 : index
      %67 = vector.load %arg9[%c0_37, %c0_38] : memref<16x1xf32, #tpu.memory_space<vmem>>, vector<16x1xf32>
      tpu.vector_store %arg9[%c0_37, %c0_38], %66 {strides = array<i32>} : memref<16x1xf32, #tpu.memory_space<vmem>>, vector<16x1xf32>,
    } else {
    }
    %c0 = arith.constant 0 : index
    %c0_1 = arith.constant 0 : index
    %3 = vector.load %arg6[%c0, %c0_1] : memref<16x32xbf16, #tpu.memory_space<vmem>>, vector<16x32xbf16>
    %c0_2 = arith.constant 0 : index
    %c0_3 = arith.constant 0 : index
    %4 = vector.load %arg3[%c0_2, %c0_3] : memref<32x128xi8, #tpu.memory_space<vmem>>, vector<32x128xi8>
    %5 = arith.sitofp %4 : vector<32x128xi8> to vector<32x128xbf16>
    %cst = arith.constant dense<0.000000e+00> : vector<16x128xf32>
    %6 = tpu.matmul %3, %5, %cst {dimension_numbers = #tpu.dot_dimension_numbers<[1], [0], [0], [1], [0, 0, 1, 1], [], []>} : vector<16x32xbf16>, vector<32x128xbf16>, vector<16x128xf32> -> vector<16x128xf32>
    %c0_4 = arith.constant 0 : index
    %c0_5 = arith.constant 0 : index
    %7 = vector.load %arg4[%c0_4, %c0_5] : memref<8x128xf32, #tpu.memory_space<vmem>>, vector<1x128xf32>
    %c1 = arith.constant 1 : index
    %c0_6 = arith.constant 0 : index
    %8 = vector.load %arg4[%c1, %c0_6] : memref<8x128xf32, #tpu.memory_space<vmem>>, vector<1x128xf32>
    %c2 = arith.constant 2 : index
    %c0_7 = arith.constant 0 : index
    %9 = vector.load %arg4[%c2, %c0_7] : memref<8x128xf32, #tpu.memory_space<vmem>>, vector<1x128xf32>
    %c3 = arith.constant 3 : index
    %c0_8 = arith.constant 0 : index
    %10 = vector.load %arg4[%c3, %c0_8] : memref<8x128xf32, #tpu.memory_space<vmem>>, vector<1x128xf32>
    %c0_9 = arith.constant 0 : index
    %c0_10 = arith.constant 0 : index
    %11 = vector.load %arg7[%c0_9, %c0_10] : memref<16x1xf32, #tpu.memory_space<vmem>>, vector<16x1xf32>
    %12 = vector.broadcast %7 : vector<1x128xf32> to vector<16x128xf32>
    %13 = arith.mulf %6, %12 : vector<16x128xf32>
    %c0_11 = arith.constant 0 : index
    %c0_12 = arith.constant 0 : index
    %14 = vector.load %arg8[%c0_11, %c0_12] : memref<16x1xf32, #tpu.memory_space<vmem>>, vector<16x1xf32>
    %15 = vector.broadcast %14 : vector<16x1xf32> to vector<16x128xf32>
    %16 = vector.broadcast %8 : vector<1x128xf32> to vector<16x128xf32>
    %17 = arith.mulf %15, %16 : vector<16x128xf32>
    %18 = arith.addf %13, %17 : vector<16x128xf32>
    %c0_13 = arith.constant 0 : index
    %c0_14 = arith.constant 0 : index
    %19 = vector.load %arg9[%c0_13, %c0_14] : memref<16x1xf32, #tpu.memory_space<vmem>>, vector<16x1xf32>
    %20 = vector.broadcast %19 : vector<16x1xf32> to vector<16x128xf32>
    %21 = vector.broadcast %9 : vector<1x128xf32> to vector<16x128xf32>
    %22 = arith.mulf %20, %21 : vector<16x128xf32>
    %23 = arith.addf %18, %22 : vector<16x128xf32>
    %24 = vector.broadcast %11 : vector<16x1xf32> to vector<16x128xf32>
    %25 = arith.mulf %24, %23 : vector<16x128xf32>
    %26 = vector.broadcast %10 : vector<1x128xf32> to vector<16x128xf32>
    %27 = arith.addf %25, %26 : vector<16x128xf32>
    %c0_15 = arith.constant 0 : index
    %c0_16 = arith.constant 0 : index
    %28 = vector.load %arg5[%c0_15, %c0_16] : memref<16x128xf32, #tpu.memory_space<vmem>>, vector<16x128xf32>
    tpu.vector_store %arg5[%c0_15, %c0_16], %27 {strides = array<i32>} : memref<16x128xf32, #tpu.memory_space<vmem>>, vector<16x128xf32>,
    return
  }
  func.func @transform_0(%arg0: i32, %arg1: i32) -> (i32, i32) {
    %c0_i32 = arith.constant 0 : i32
    %c0_i32_0 = arith.constant 0 : i32
    return %arg0, %c0_i32 : i32, i32
  }
  func.func @transform_1(%arg0: i32, %arg1: i32) -> (i32, i32) {
    %c0_i32 = arith.constant 0 : i32
    %c0_i32_0 = arith.constant 0 : i32
    return %c0_i32, %arg1 : i32, i32
  }
  func.func @transform_2(%arg0: i32, %arg1: i32) -> (i32, i32) {
    %c0_i32 = arith.constant 0 : i32
    %c0_i32_0 = arith.constant 0 : i32
    return %c0_i32, %arg1 : i32, i32
  }
  func.func @transform_3(%arg0: i32, %arg1: i32) -> (i32, i32) {
    %c0_i32 = arith.constant 0 : i32
    return %arg0, %arg1 : i32, i32
  }
}

</mosaic_0001>

<llo_original>
// kernel: _linear_asq_impl.1
$region0: #{_linear_asq_impl.1}
  #allocation0 [shape = 'u32[]', space=smem, size = 0x4, offset = 0x4, fixed_abs, tag = 'smem constant byte address 0x4 - core index']
  #allocation1 [shape = 'u32[144,128]{1,0:T(1,128)}', space=vmem, size = 0x12000, scoped, tag = 'internal scratch']
  #allocation2 [shape = 'bf16[16,32]{1,0:T(16,128)(2,1)}', space=vmem, size = 0x1000, scoped, tag = 'scratch operand']
  #allocation3 [shape = 'f32[16,1]{1,0:T(8,128)}', space=vmem, size = 0x2000, scoped, tag = 'scratch operand']
  #allocation4 [shape = 'f32[16,1]{1,0:T(8,128)}', space=vmem, size = 0x2000, scoped, tag = 'scratch operand']
  #allocation5 [shape = 'f32[16,1]{1,0:T(8,128)}', space=vmem, size = 0x2000, scoped, tag = 'scratch operand']
  %s0 = inlined_call_operand.vmem [shape: f32[16,32], index: 0, kind: input, shape index: {}]
  %s1 = inlined_call_operand.vmem [shape: s8[32,128], index: 1, kind: input, shape index: {}]
  %s2 = inlined_call_operand.vmem [shape: f32[8,128], index: 2, kind: input, shape index: {}]
  %s3 = inlined_call_operand.vmem [shape: f32[16,128], index: 3, kind: output, shape index: {}]
  %s4 = sld [smem:[#allocation0]]
  $region26: #{_linear_asq_impl.1} parent=0
    _
  %s6 = ssub.s32 1, %s4
  %s7 = scalar_select 0, %s6, %s4
  // Predicated region
  $region2: #{_linear_asq_impl.1} parent=0 // pred_check
    _
  $region3: #{_linear_asq_impl.1} parent=0 // pred_check_branch
    %9 = sbr.rel (0) target = $region5
  $region4: #{_linear_asq_impl.1} parent=0 // pred_region
    _
  $region5: #{_linear_asq_impl.1} parent=0 // pred_fallthru
    _
  // Predicated region
  $region6: #{_linear_asq_impl.1} parent=0 // pred_check
    _
  $region7: #{_linear_asq_impl.1} parent=0 // pred_check_branch
    %11 = sbr.rel (0) target = $region9
  $region8: #{_linear_asq_impl.1} parent=0 // pred_region
    _
  $region9: #{_linear_asq_impl.1} parent=0 // pred_fallthru
    _
  // Predicated region
  $region10: #{_linear_asq_impl.1} parent=0 // pred_check
    _
  $region11: #{_linear_asq_impl.1} parent=0 // pred_check_branch
    %13 = sbr.rel (0) target = $region13
  $region12: #{_linear_asq_impl.1} parent=0 // pred_region
    _
  $region13: #{_linear_asq_impl.1} parent=0 // pred_fallthru
    _
  %p15 = scmp.eq.s32.totalorder 0, 0
  // Predicated region
  $region14: #{_linear_asq_impl.1} parent=0 // pred_check
    %p16 = pneg %p15
  $region15: #{_linear_asq_impl.1} parent=0 // pred_check_branch
    %18 = sbr.rel (%p16) target = $region17
  $region16: #{_linear_asq_impl.1} parent=0 // pred_region
    %v19 = vld [vmem:[%s0] sm:$0xff]
    %v20 = vld [vmem:[%s0 + $0x8] sm:$0xff]
    %vm21 = vcmask 261120
    %v22 = vsel %vm21, %v19, -inf
    %23 = vmax.xlane.f32.xlu0 %v22
    %v24 = vpop.xlane.xlu0 %23
    %v25 = vsel %vm21, %v20, -inf
    %26 = vmax.xlane.f32.xlu0 %v25
    %v27 = vpop.xlane.xlu0 %26
    %v28 = vsel %vm21, %v19, inf
    %29 = vmin.xlane.f32.xlu0 %v28
    %v30 = vpop.xlane.xlu0 %29
    %v31 = vsel %vm21, %v20, inf
    %32 = vmin.xlane.f32.xlu0 %v31
    %v33 = vpop.xlane.xlu0 %32
    %v34 = vsub.f32 %v24, %v30
    %v35 = vsub.f32 %v27, %v33
    %v36 = vmax.f32 %v34, 1e-08
    %v37 = vmax.f32 %v35, 1e-08
    %v38 = vmul.f32 %v36, 0.003921569
    %v39 = vmul.f32 %v37, 0.003921569
    %v40 = vrcp.pop %v38
    %v41 = vmul.f32 1.0, %v40
    %v42 = vrcp.pop %v39
    %v43 = vmul.f32 1.0, %v42
    %v44 = vsub.f32 0.0, %v30
    %v45 = vsub.f32 0.0, %v33
    %v46 = vmul.f32 %v44, %v40
    %v47 = vmul.f32 %v45, %v42
    %v48 = vround.ne.pseudo %v46
    %v49 = vround.ne.pseudo %v47
    %v50 = vmul.f32 %v19, %v41
    %v51 = vmul.f32 %v20, %v43
    %v52 = vround.ne.pseudo %v50
    %v53 = vround.ne.pseudo %v51
    %v54 = vadd.f32 %v52, %v48
    %v55 = vadd.f32 %v53, %v49
    %v56 = vmax.f32 %v54, 0.0
    %v57 = vmax.f32 %v55, 0.0
    %v58 = vmin.f32 %v56, 255.0
    %v59 = vmin.f32 %v57, 255.0
    %v60 = vsel %vm21, %v58, 0.0
    %61 = vadd.xlane.f32.xlu0 %v60
    %v62 = vpop.xlane.xlu0 %61
    %v63 = vsel %vm21, %v59, 0.0
    %64 = vadd.xlane.f32.xlu0 %v63
    %v65 = vpop.xlane.xlu0 %64
    %v66 = vsub.f32 %v58, 128.0
    %v67 = vsub.f32 %v59, 128.0
    %v68 = vpack.c.bf16 %v67, %v66
    %69 = vst.msk [vmem:[#allocation2] sm:$0xff] %vm21, %v68
    %vm70 = vcmask 7168
    %71 = vst.msk [vmem:[#allocation3] sm:$0xff] %vm70, %v38
    %72 = vst.msk [vmem:[#allocation3 + $0x8] sm:$0xff] %vm70, %v39
    %v73 = vsub.f32 128.0, %v48
    %v74 = vsub.f32 128.0, %v49
    %75 = vst.msk [vmem:[#allocation4] sm:$0xff] %vm70, %v73
    %76 = vst.msk [vmem:[#allocation4 + $0x8] sm:$0xff] %vm70, %v74
    %v77 = vmul.f32 %v48, 32.0
    %v78 = vmul.f32 %v49, 32.0
    %v79 = vsub.f32 %v77, %v62
    %v80 = vsub.f32 %v78, %v65
    %81 = vst.msk [vmem:[#allocation5] sm:$0xff] %vm70, %v79
    %82 = vst.msk [vmem:[#allocation5 + $0x8] sm:$0xff] %vm70, %v80
  $region17: #{_linear_asq_impl.1} parent=0 // pred_fallthru
    _
  %v83 = vld [vmem:[#allocation2] sm:$0xff]
  %v84 = vld [vmem:[%s1] sm:$0xff]
  %v85 = vunpack.c.l.s8.bf16 %v84
  %v86 = vunpack.c.h.s8.bf16 %v84
  %vm87 = vcmask 261120
  %v89 = vsel %vm87, %v83, 0
  %91 = vmatprep.subr.bf16.mxu0 0
  %92 = vmatpush1.bf16.msra.mxu0 %v85
  %93 = vmatprep.subr.bf16.mxu0 0
  %94 = vmatpush1.bf16.msra.mxu0 %v86
  %95 = vmatprep.subr.bf16.mxu0 0
  %96 = vmatpush1.bf16.msra.mxu0 0
  %97 = vmatprep.subr.bf16.mxu0 0
  %98 = vmatpush1.bf16.msra.mxu0 0
  %99 = vmatprep.subr.bf16.mxu0 0
  %100 = vmatpush1.bf16.msra.mxu0 0
  %101 = vmatprep.subr.bf16.mxu0 0
  %102 = vmatpush1.bf16.msra.mxu0 0
  %103 = vmatprep.subr.bf16.mxu0 0
  %104 = vmatpush1.bf16.msra.mxu0 0
  %105 = vmatprep.subr.bf16.mxu0 0
  %106 = vmatpush1.bf16.msra.mxu0 0
  %107 = vmatprep.subr.bf16.mxu0 0
  %108 = vmatpush1.bf16.msra.mxu0 0
  %109 = vmatprep.subr.bf16.mxu0 0
  %110 = vmatpush1.bf16.msra.mxu0 0
  %111 = vmatprep.subr.bf16.mxu0 0
  %112 = vmatpush1.bf16.msra.mxu0 0
  %113 = vmatprep.subr.bf16.mxu0 0
  %114 = vmatpush1.bf16.msra.mxu0 0
  %115 = vmatprep.subr.bf16.mxu0 0
  %116 = vmatpush1.bf16.msra.mxu0 0
  %117 = vmatprep.subr.bf16.mxu0 0
  %118 = vmatpush1.bf16.msra.mxu0 0
  %119 = vmatprep.subr.bf16.mxu0 0
  %120 = vmatpush1.bf16.msra.mxu0 0
  %121 = vmatprep.subr.bf16.mxu0 0
  %122 = vmatpush1.bf16.msra.mxu0 0
  %123 = vmatprep.mubr.bf16.mxu0 0
  %124 = vmatmul.mubr.bf16.gmra.mrb[0].mxu0 %v89
  %v125 = vpop.f32.mrb[0].mxu0
  %v126 = vadd.f32 0.0, %v125
  %v127 = vpop.f32.mrb[0].mxu0
  %v128 = vpop.f32.mrb[0].mxu0
  %v129 = vadd.f32 0.0, %v128
  %v130 = vpop.f32.mrb[0].mxu0
  %131 = vdwg.mxu0
  %v132 = vld [vmem:[%s2] sm:$0x1]
  %v133 = vld [vmem:[%s2 + $0x1] sm:$0x1]
  %v134 = vld [vmem:[%s2 + $0x2] sm:$0x1]
  %v135 = vld [vmem:[%s2 + $0x3] sm:$0x1]
  %v136 = vld [vmem:[#allocation3] sm:$0xff]
  %v137 = vld [vmem:[#allocation3 + $0x8] sm:$0xff]
  %v138 = vlaneseq
  %v139 = vshrl.u32 %v138, 7
  %v140 = vsub.s32 0, %v139
  %v141 = vrot.slane %v132, %v140
  %v142 = vmul.f32 %v126, %v141
  %v143 = vmul.f32 %v129, %v141
  %v144 = vld [vmem:[#allocation4] sm:$0xff]
  %v145 = vld [vmem:[#allocation4 + $0x8] sm:$0xff]
  %147 = vset.pattern.permute.xlu0 0
  %148 = vperm.xlu0 %147, %v144
  %v149 = vpop.permute.xlu0 %148
  %152 = vset.pattern.permute.xlu0 0
  %153 = vperm.xlu0 %152, %v145
  %v154 = vpop.permute.xlu0 %153
  %v156 = vlaneseq
  %v157 = vshrl.u32 %v156, 7
  %v158 = vsub.s32 0, %v157
  %v159 = vrot.slane %v133, %v158
  %v160 = vmul.f32 %v149, %v159
  %v161 = vmul.f32 %v154, %v159
  %v162 = vadd.f32 %v142, %v160
  %v163 = vadd.f32 %v143, %v161
  %v164 = vld [vmem:[#allocation5] sm:$0xff]
  %v165 = vld [vmem:[#allocation5 + $0x8] sm:$0xff]
  %167 = vset.pattern.permute.xlu0 0
  %168 = vperm.xlu0 %167, %v164
  %v169 = vpop.permute.xlu0 %168
  %172 = vset.pattern.permute.xlu0 0
  %173 = vperm.xlu0 %172, %v165
  %v174 = vpop.permute.xlu0 %173
  %v176 = vlaneseq
  %v177 = vshrl.u32 %v176, 7
  %v178 = vsub.s32 0, %v177
  %v179 = vrot.slane %v134, %v178
  %v180 = vmul.f32 %v169, %v179
  %v181 = vmul.f32 %v174, %v179
  %v182 = vadd.f32 %v162, %v180
  %v183 = vadd.f32 %v163, %v181
  %185 = vset.pattern.permute.xlu0 0
  %186 = vperm.xlu0 %185, %v136
  %v187 = vpop.permute.xlu0 %186
  %190 = vset.pattern.permute.xlu0 0
  %191 = vperm.xlu0 %190, %v137
  %v192 = vpop.permute.xlu0 %191
  %v194 = vmul.f32 %v187, %v182
  %v195 = vmul.f32 %v192, %v183
  %v196 = vlaneseq
  %v197 = vshrl.u32 %v196, 7
  %v198 = vsub.s32 0, %v197
  %v199 = vrot.slane %v135, %v198
  %v200 = vadd.f32 %v194, %v199
  %v201 = vadd.f32 %v195, %v199
  %202 = vst [vmem:[%s3] sm:$0xff] %v200
  %203 = vst [vmem:[%s3 + $0x8] sm:$0xff] %v201
  // Predicated region
  $region18: #{_linear_asq_impl.1} parent=0 // pred_check
    _
  $region19: #{_linear_asq_impl.1} parent=0 // pred_check_branch
    %205 = sbr.rel (0) target = $region21
  $region20: #{_linear_asq_impl.1} parent=0 // pred_region
    _
  $region21: #{_linear_asq_impl.1} parent=0 // pred_fallthru
    _
  // Predicated region
  $region22: #{_linear_asq_impl.1} parent=0 // pred_check
    _
  $region23: #{_linear_asq_impl.1} parent=0 // pred_check_branch
    %207 = sbr.rel (0) target = $region25
  $region24: #{_linear_asq_impl.1} parent=0 // pred_region
    _
  $region25: #{_linear_asq_impl.1} parent=0 // pred_fallthru
    _

</llo_original>
